<compile_context>
chip_gen: v5e
topology: v5e:2x2
jax: 0.10.0
libtpu: 0.0.40
codegen_flags: <defaults>
</compile_context>

<pallas_src>
import math

import jax
import jax.numpy as jnp
from jax.experimental import pallas as pl
from jax.experimental.pallas import tpu as pltpu


def _round_up(a: int, m: int) -> int:
    return ((a + m - 1) // m) * m


def _build_fixed_embedding_table(c_in: int, d_model: int) -> jnp.ndarray:
    """Deterministic sinusoidal table, mirrors the PyTorch __init__."""
    assert d_model % 2 == 0, "d_model must be even (matches typical usage)"
    position = jnp.arange(c_in, dtype=jnp.float32)[:, None]                    # (c_in, 1)
    div_term = jnp.exp(
        jnp.arange(0, d_model, 2, dtype=jnp.float32) * -(math.log(10000.0) / d_model)
    )                                                                           # (d_model/2,)
    w = jnp.zeros((c_in, d_model), dtype=jnp.float32)
    w = w.at[:, 0::2].set(jnp.sin(position * div_term))
    w = w.at[:, 1::2].set(jnp.cos(position * div_term))
    return w


def _num_tensorcores() -> int:
    """Perf heuristic only (never affects correctness)."""
    try:
        kind = jax.devices()[0].device_kind.lower()
    except Exception:
        return 1
    # v5e / v6e expose one TensorCore per device; treat everything else
    # (v4 megacore, v7x, ...) as 2 so a >=2-step parallel grid can help.
    if "v5" in kind or "v6" in kind:
        return 1
    return 2


def _fixed_embedding_kernel(idx_ref, table_ref, out_ref):
    # idx_ref:   (TN, 1)          int32  tile of flattened indices
    # table_ref: (c_in, d_model)  f32    full table (grid-invariant, resident)
    # out_ref:   (TN, d_model)    f32    gathered rows (unpadded store)
    tn = idx_ref.shape[0]
    c_in = table_ref.shape[0]
    idx = idx_ref[...]                                                   # (TN, 1)
    iota = jax.lax.broadcasted_iota(jnp.int32, (tn, c_in), 1)            # (TN, c_in)
    onehot = (iota == idx).astype(jnp.float32)                           # (TN, c_in)
    out_ref[...] = jnp.dot(
        onehot, table_ref[...], preferred_element_type=jnp.float32
    )
    # TODO(synk): for large vocab (c_in >> ~512) replace the one-hot MXU path
    # with a scalar-prefetch row gather (PrefetchScalarGridSpec + pl.Element).


def fixed_embedding(x: jnp.ndarray, table: jnp.ndarray, *, tile_n: int = 1024) -> jnp.ndarray:
    """out = table[x]; x int of any shape; returns x.shape + (d_model,) float32."""
    c_in, d_model = table.shape
    batch_shape = x.shape
    n = 1
    for s in batch_shape:
        n *= int(s)
    if n == 0:
        return jnp.zeros((*batch_shape, d_model), dtype=jnp.float32)

    table_f32 = table.astype(jnp.float32)
    idx_flat = x.reshape(n, 1).astype(jnp.int32)

    # ---- row tile selection ------------------------------------------------
    n_cores = _num_tensorcores()
    if n_cores > 1:
        # Multi-TC (v7x / megacore): even grid count >= 2 for balanced cores.
        tn = max(8, min(int(tile_n), _round_up(pl.cdiv(n, 2), 8)))
        steps = pl.cdiv(n, tn)
        if steps > 1 and steps % 2 == 1:
            tn = max(8, _round_up(pl.cdiv(n, steps + 1), 8))
    else:
        # Single TC (v5e/v6e): extra grid steps are pure overhead for small N.
        tn = max(8, min(int(tile_n), _round_up(n, 8)))

    grid = (pl.cdiv(n, tn),)   # Pallas masks the tail block; no pad / slice.

    # ---- VMEM budget: actual need with ~2x headroom, 4 MiB floor ------------
    table_bytes = c_in * d_model * 4
    need = (2 * table_bytes            # table (<= 2 pipeline buffers)
            + 2 * (tn * d_model * 4)   # double-buffered output tile
            + 2 * (tn * 4)             # double-buffered index tile
            + tn * c_in * 4)           # one-hot intermediate
    vmem_limit = min(max(2 * need, 4 * 1024 * 1024), 64 * 1024 * 1024)

    def _run(single_buffer_table: bool):
        if single_buffer_table and hasattr(pl, "Buffered"):
            # Table is grid-invariant (constant index_map): one VMEM copy is
            # enough; default pipelining would allocate two.
            table_spec = pl.BlockSpec(
                (c_in, d_model), lambda i: (0, 0),
                pipeline_mode=pl.Buffered(buffer_count=1),
            )
        else:
            table_spec = pl.BlockSpec((c_in, d_model), lambda i: (0, 0))
        return pl.pallas_call(
            _fixed_embedding_kernel,
            out_shape=jax.ShapeDtypeStruct((n, d_model), jnp.float32),
            grid_spec=pltpu.PrefetchScalarGridSpec(
                num_scalar_prefetch=0,
                grid=grid,
                in_specs=[
                    pl.BlockSpec((tn, 1), lambda i: (i, 0)),        # index tile
                    table_spec,                                      # full table
                ],
                out_specs=pl.BlockSpec((tn, d_model), lambda i: (i, 0)),
            ),
            compiler_params=pltpu.CompilerParams(
                dimension_semantics=("parallel",),
                vmem_limit_bytes=vmem_limit,
            ),
        )(idx_flat, table_f32)

    try:
        out_flat = _run(True)
    except (TypeError, ValueError, NotImplementedError, pltpu.LoweringException):
        # Narrow fallback: default double-buffering of the (tiny) table.
        out_flat = _run(False)

    return out_flat.reshape(*batch_shape, d_model)


if __name__ == "__main__":
    # Small shapes consistent with the module (e.g. a "day-of-month" embedding).
    c_in, d_model = 32, 32
    B, L = 2, 8

    table = _build_fixed_embedding_table(c_in, d_model)

    key = jax.random.PRNGKey(0)
    x = jax.random.randint(key, (B, L), minval=0, maxval=c_in, dtype=jnp.int32)

    out = fixed_embedding(x, table)
    out = jax.block_until_ready(out)

    # Reference: plain JAX gather (same semantics as nn.Embedding lookup).
    ref = table[x]
    assert out.shape == (B, L, d_model)
    assert out.dtype == jnp.float32
    assert jnp.allclose(out, ref, atol=1e-6), "mismatch vs reference gather"

    print("KERNEL_OK")
</pallas_src>

<mosaic_0001>
module attributes {stable_mosaic.version = 11 : i64} {
  func.func @_fixed_embedding_kernel(%arg0: i32, %arg1: memref<8x1xi32, #tpu.memory_space<vmem>>, %arg2: memref<32x32xf32, #tpu.memory_space<vmem>>, %arg3: memref<8x32xf32, #tpu.memory_space<vmem>>) attributes {dimension_semantics = [#tpu.dimension_semantics<parallel>], iteration_bounds = array<i64: 2>, scalar_prefetch = 0 : i64, scratch_operands = 0 : i64, tpu.core_type = #tpu.core_type<tc>, window_params = [{transform_indices = @transform_0, window_bounds = array<i64: 8, 1>}, {pipeline_mode = #tpu.pipeline_mode<synchronous>, transform_indices = @transform_1, window_bounds = array<i64: 32, 32>}, {transform_indices = @transform_2, window_bounds = array<i64: 8, 32>}]} {
    %c0 = arith.constant 0 : index
    %c0_0 = arith.constant 0 : index
    %0 = vector.load %arg1[%c0, %c0_0] : memref<8x1xi32, #tpu.memory_space<vmem>>, vector<8x1xi32>
    %1 = tpu.iota {dimensions = array<i32: 1>} : vector<8x32xi32>
    %2 = vector.broadcast %0 : vector<8x1xi32> to vector<8x32xi32>
    %3 = arith.cmpi eq, %1, %2 : vector<8x32xi32>
    %4 = arith.extui %3 : vector<8x32xi1> to vector<8x32xi32>
    %5 = arith.sitofp %4 : vector<8x32xi32> to vector<8x32xf32>
    %c0_1 = arith.constant 0 : index
    %c0_2 = arith.constant 0 : index
    %6 = vector.load %arg2[%c0_1, %c0_2] : memref<32x32xf32, #tpu.memory_space<vmem>>, vector<32x32xf32>
    %cst = arith.constant dense<0.000000e+00> : vector<8x32xf32>
    %7 = tpu.matmul %5, %6, %cst {dimension_numbers = #tpu.dot_dimension_numbers<[1], [0], [0], [1], [0, 0, 1, 1], [], []>} : vector<8x32xf32>, vector<32x32xf32>, vector<8x32xf32> -> vector<8x32xf32>
    %c0_3 = arith.constant 0 : index
    %c0_4 = arith.constant 0 : index
    %8 = vector.load %arg3[%c0_3, %c0_4] : memref<8x32xf32, #tpu.memory_space<vmem>>, vector<8x32xf32>
    tpu.vector_store %arg3[%c0_3, %c0_4], %7 {strides = array<i32>} : memref<8x32xf32, #tpu.memory_space<vmem>>, vector<8x32xf32>,
    return
  }
  func.func @transform_0(%arg0: i32) -> (i32, i32) {
    %c0_i32 = arith.constant 0 : i32
    %c0_i32_0 = arith.constant 0 : i32
    return %arg0, %c0_i32 : i32, i32
  }
  func.func @transform_1(%arg0: i32) -> (i32, i32) {
    %c0_i32 = arith.constant 0 : i32
    %c0_i32_0 = arith.constant 0 : i32
    %c0_i32_1 = arith.constant 0 : i32
    return %c0_i32, %c0_i32_0 : i32, i32
  }
  func.func @transform_2(%arg0: i32) -> (i32, i32) {
    %c0_i32 = arith.constant 0 : i32
    %c0_i32_0 = arith.constant 0 : i32
    return %arg0, %c0_i32 : i32, i32
  }
}

</mosaic_0001>

<llo_original>
// kernel: tpu_custom_call.1
$region0: #{tpu_custom_call.1}
  #allocation0 [shape = 'u32[]', space=smem, size = 0x4, offset = 0x4, fixed_abs, tag = 'smem constant byte address 0x4 - core index']
  #allocation1 [shape = 'u32[72,128]{1,0:T(1,128)}', space=vmem, size = 0x9000, scoped, tag = 'internal scratch']
  %s0 = inlined_call_operand.vmem [shape: s32[16,1], index: 0, kind: input, shape index: {}]
  %s1 = inlined_call_operand.hbm [shape: f32[32,32], index: 1, kind: input, shape index: {}]
  %s2 = inlined_call_operand.hbm [shape: f32[16,32], index: 2, kind: output, shape index: {}]
  %s3 = sld [smem:[#allocation0]]
  $region45: #{tpu_custom_call.1} parent=0
    _
  %s5 = ssub.s32 1, %s3
  %s6 = scalar_select 0, %s5, %s3
  $region1: #{tpu_custom_call.1} parent=0
    #allocation2 [shape = 'u8[16384]{0}', space=vmem, size = 0x4000, scoped, tag = 'input window, operand 1, single buffered']
    #allocation3 [shape = 's32[2]{0}', space=sflag, size = 0x8, scoped, tag = 'scoped memory for tpu_custom_call.1']
    #allocation4 [shape = 's32[2]{0}', space=sflag, size = 0x8, scoped, tag = 'scoped memory for tpu_custom_call.1']
    #allocation5 [shape = 'u8[8192]{0}', space=vmem, size = 0x2000, scoped, tag = 'output window, operand 0']
    %7 = vsyncpa [#allocation3], 0
    %8 = vsyncpa [#allocation4], 0
    %s9 = scalar_lea.sflag [#allocation4], 1
    %10 = vsyncpa %s9, 0
    loop: start=0, step=1, limit=4
    $region2: #{tpu_custom_call.1} parent=1 // loop_pre_header
      _
    $region3: #{tpu_custom_call.1} parent=1 // loop_header
      %s12 = sphi 0, %s16
      %p13 = scmp.ge.s32.totalorder %s12, 4
      %s22 = sphi 0, %s24
      %s25 = sphi 0, %s22
      %s26 = sphi 0, %s25
      %s42 = sphi 0, %s26
      %s46 = sphi 0, %s46
      %s48 = sphi 0, %s46
      %s49 = sphi 0, %s48
      %s63 = sphi 0, %s49
      %s69 = sphi 0, %s71
      %s72 = sphi 0, %s69
      %s73 = sphi 0, %s72
      %s89 = sphi 0, %s73
    $region4: #{tpu_custom_call.1} parent=1 // loop_header_branch
      %15 = sbr.rel (%p13) target = $region8
    $region5: #{tpu_custom_call.1} parent=1 // loop_body
      %s17 = ssub.s32 %s12, 1
      %s18 = ssub.s32 %s12, 2
      %s19 = sadd.s32 %s12, 1
      %s20 = ssub.s32 %s12, %s19
      %p21 = scmp.eq.s32.totalorder %s20, 0
      %s23 = sadd.s32 %s22, 1
      %s24 = scalar_select %p21, %s22, %s23
      %p27 = pneg %p21
      %p28 = scmp.eq.s32.totalorder %s12, 1
      %p29 = por %p27, %p28
      %p30 = scmp.ne.s32.totalorder %s22, %s25
      %p31 = scmp.eq.s32.totalorder %s12, 0
      %p32 = por %p30, %p31
      %p33 = scmp.ne.s32.totalorder %s22, %s25
      %p34 = scmp.eq.s32.totalorder %s17, 1
      %p35 = por %p33, %p34
      %p36 = scmp.ne.s32.totalorder %s25, %s26
      %p37 = scmp.eq.s32.totalorder %s17, 0
      %p38 = por %p36, %p37
      %p39 = scmp.ne.s32.totalorder %s25, %s26
      %p40 = scmp.eq.s32.totalorder %s18, 1
      %p41 = por %p39, %p40
      %p43 = scmp.ne.s32.totalorder %s26, %s42
      %p44 = scmp.eq.s32.totalorder %s18, 0
      %p45 = por %p43, %p44
      %s47 = sadd.s32 %s46, 1
      %p50 = scmp.eq.s32.totalorder %s12, 1
      %p51 = scmp.ne.s32.totalorder %s46, %s48
      %p52 = scmp.eq.s32.totalorder %s12, 0
      %p53 = por %p51, %p52
      %p54 = scmp.ne.s32.totalorder %s46, %s48
      %p55 = scmp.eq.s32.totalorder %s17, 1
      %p56 = por %p54, %p55
      %p57 = scmp.ne.s32.totalorder %s48, %s49
      %p58 = scmp.eq.s32.totalorder %s17, 0
      %p59 = por %p57, %p58
      %p60 = scmp.ne.s32.totalorder %s48, %s49
      %p61 = scmp.eq.s32.totalorder %s18, 1
      %p62 = por %p60, %p61
      %p64 = scmp.ne.s32.totalorder %s49, %s63
      %p65 = scmp.eq.s32.totalorder %s18, 0
      %p66 = por %p64, %p65
      %s67 = ssub.s32 %s12, %s19
      %p68 = scmp.eq.s32.totalorder %s67, 0
      %s70 = sadd.s32 %s69, 1
      %s71 = scalar_select %p68, %s69, %s70
      %p74 = pneg %p68
      %p75 = scmp.eq.s32.totalorder %s12, 1
      %p76 = por %p74, %p75
      %p77 = scmp.ne.s32.totalorder %s69, %s72
      %p78 = scmp.eq.s32.totalorder %s12, 0
      %p79 = por %p77, %p78
      %p80 = scmp.ne.s32.totalorder %s69, %s72
      %p81 = scmp.eq.s32.totalorder %s17, 1
      %p82 = por %p80, %p81
      %p83 = scmp.ne.s32.totalorder %s72, %s73
      %p84 = scmp.eq.s32.totalorder %s17, 0
      %p85 = por %p83, %p84
      %p86 = scmp.ne.s32.totalorder %s72, %s73
      %p87 = scmp.eq.s32.totalorder %s18, 1
      %p88 = por %p86, %p87
      %p90 = scmp.ne.s32.totalorder %s73, %s89
      %p91 = scmp.eq.s32.totalorder %s18, 0
      %p92 = por %p90, %p91
      %p93 = scmp.le.s32.totalorder 1, %s12
      %p94 = scmp.lt.s32.totalorder %s12, 3
      %p95 = pnand %p93, %p94
      %p96 = pneg %p95
      // Predicated region
      $region9: #{tpu_custom_call.1} parent=5 // pred_check
        _
      $region10: #{tpu_custom_call.1} parent=5 // pred_check_branch
        %98 = sbr.rel (%p95) target = $region12
      $region11: #{tpu_custom_call.1} parent=5 // pred_region
        %s99 = ssub.s32 %s12, 1
        // Predicated region
        $region13: #{tpu_custom_call.1} parent=11 // pred_check
          %p100 = pneg %p59
        $region14: #{tpu_custom_call.1} parent=11 // pred_check_branch
          %102 = sbr.rel (%p100) target = $region16
        $region15: #{tpu_custom_call.1} parent=11 // pred_region
          %104 = vsyncadd [#allocation3], 0
          %s105 = sshll.u32 %s1, 4
          %s106 = int_to_ptr.hbm [resolvable:$true] %s105
          %s107 = sshll.u32 [#allocation2], 4
          %s108 = int_to_ptr.vmem [resolvable:$true] %s107
          %113 = dma.hbm_to_vmem [thread:$0]  %s106, 512, %s108, [#allocation3], 128, 128, 8
        $region16: #{tpu_custom_call.1} parent=11 // pred_fallthru
          _
      $region12: #{tpu_custom_call.1} parent=5 // pred_fallthru
        _
      %p114 = scmp.lt.s32.totalorder %s12, 2
      // Predicated region
      $region17: #{tpu_custom_call.1} parent=5 // pred_check
        %p115 = pneg %p114
      $region18: #{tpu_custom_call.1} parent=5 // pred_check_branch
        %117 = sbr.rel (%p115) target = $region20
      $region19: #{tpu_custom_call.1} parent=5 // pred_region
        // Predicated region
        $region21: #{tpu_custom_call.1} parent=19 // pred_check
          %p118 = pneg %p32
        $region22: #{tpu_custom_call.1} parent=19 // pred_check_branch
          %120 = sbr.rel (%p118) target = $region24
        $region23: #{tpu_custom_call.1} parent=19 // pred_region
          %p121 = scmp.lt.s32.totalorder %s12, 1
          %s122 = scalar_select %p121, %s12, 1
          %s123 = smul.addr %s122, 8
          %s124 = scalar_lea.vmem %s0, %s123
        $region24: #{tpu_custom_call.1} parent=19 // pred_fallthru
          _
      $region20: #{tpu_custom_call.1} parent=5 // pred_fallthru
        _
      %p125 = scmp.le.s32.totalorder 1, %s12
      %p126 = scmp.lt.s32.totalorder %s12, 3
      %p127 = pnand %p125, %p126
      %p128 = pneg %p127
      // Predicated region
      $region25: #{tpu_custom_call.1} parent=5 // pred_check
        _
      $region26: #{tpu_custom_call.1} parent=5 // pred_check_branch
        %130 = sbr.rel (%p127) target = $region28
      $region27: #{tpu_custom_call.1} parent=5 // pred_region
        %s131 = ssub.s32 %s12, 1
        // Predicated region
        $region29: #{tpu_custom_call.1} parent=27 // pred_check
          %p132 = pneg %p59
        $region30: #{tpu_custom_call.1} parent=27 // pred_check_branch
          %134 = sbr.rel (%p132) target = $region32
        $region31: #{tpu_custom_call.1} parent=27 // pred_region
          %136 = dma.done [#allocation3], 512
        $region32: #{tpu_custom_call.1} parent=27 // pred_fallthru
          _
        %p137 = scmp.lt.s32.totalorder %s17, 1
        %s138 = scalar_select %p137, %s17, 1
        %s139 = smul.addr %s138, 8
        %s140 = scalar_lea.vmem %s0, %s139
        %p141 = pneg %p38
        %p142 = pneg %p35
        %p143 = pneg %p59
        %p144 = pneg %p56
        %p145 = pneg %p85
        %p146 = pneg %p82
        %s147 = sand.u32 %s72, 1
        %s148 = scalar_lea.sflag [#allocation4], %s147
        %s149 = sand.u32 %s72, 1
        %s150 = smul.addr %s149, 8
        %s151 = scalar_lea.vmem [#allocation5], %s150
        %p152 = scmp.lt.s32.totalorder %s17, 1
        %s153 = scalar_select %p152, %s17, 1
        %s154 = smul.addr %s153, 8
        %s155 = scalar_lea.vmem %s0, %s154
        %v156 = vld [vmem:[%s155] sm:$0xff]
        %v157 = vlaneseq
        %v158 = vand.u32 %v157, 127
        %159 = vset.pattern.permute.xlu0 0
        %160 = vperm.xlu0 %159, %v156
        %v161 = vpop.permute.xlu0 %160
        %vm162 = vcmp.eq.s32.totalorder %v158, %v161
        %v163 = vsel %vm162, 1, 0
        %v164 = vcvt.s32.f32 %v163
        %v165 = vld [vmem:[#allocation2] sm:$0xff]
        %v166 = vld [vmem:[#allocation2 + $0x8] sm:$0xff]
        %v167 = vld [vmem:[#allocation2 + $0x10] sm:$0xff]
        %v168 = vld [vmem:[#allocation2 + $0x18] sm:$0xff]
        %vm169 = vcmask 261120
        %v171 = vsel %vm169, %v164, 0
        %173 = vmatpush.msra.mxu0 0.0
        %174 = vmatpush.msra.mxu0 0.0
        %175 = vmatpush.msra.mxu0 0.0
        %176 = vmatpush.msra.mxu0 0.0
        %177 = vmatpush.msra.mxu0 0.0
        %178 = vmatpush.msra.mxu0 0.0
        %179 = vmatpush.msra.mxu0 0.0
        %180 = vmatpush.msra.mxu0 0.0
        %181 = vmatpush.msra.mxu0 0.0
        %182 = vmatpush.msra.mxu0 0.0
        %183 = vmatpush.msra.mxu0 0.0
        %184 = vmatpush.msra.mxu0 0.0
        %185 = vmatpush.msra.mxu0 %v168
        %186 = vmatpush.msra.mxu0 %v167
        %187 = vmatpush.msra.mxu0 %v166
        %188 = vmatpush.msra.mxu0 %v165
        %189 = vmatmul.f32.gmra.mxu0 %v171
        %v190 = vpop.f32.mrf.mxu0
        %v191 = vadd.f32 0.0, %v190
        %192 = vdwg.mxu0
        %193 = vst.msk [vmem:[%s151] sm:$0xff] %vm169, %v191
        %s194 = sand.u32 %s72, 1
        %s195 = scalar_lea.sflag [#allocation4], %s194
        %s196 = sand.u32 %s72, 1
        %s197 = smul.addr %s196, 8
        %s198 = scalar_lea.vmem [#allocation5], %s197
        // Predicated region
        $region33: #{tpu_custom_call.1} parent=27 // pred_check
          %p199 = pneg %p82
        $region34: #{tpu_custom_call.1} parent=27 // pred_check_branch
          %201 = sbr.rel (%p199) target = $region36
        $region35: #{tpu_custom_call.1} parent=27 // pred_region
          %203 = vsyncadd %s195, 0
          %s204 = smul.addr %s17, 8
          %s205 = scalar_lea.hbm %s2, %s204
          %s207 = sshll.u32 %s198, 4
          %s208 = int_to_ptr.vmem [resolvable:$true] %s207
          %s209 = sshll.u32 %s205, 4
          %s210 = int_to_ptr.hbm [resolvable:$true] %s209
          %212 = dma.vmem_to_hbm [thread:$0]  %s208, 128, %s210, %s195
        $region36: #{tpu_custom_call.1} parent=27 // pred_fallthru
          _
      $region28: #{tpu_custom_call.1} parent=5 // pred_fallthru
        _
      %p213 = scmp.le.s32.totalorder 2, %s12
      // Predicated region
      $region37: #{tpu_custom_call.1} parent=5 // pred_check
        %p214 = pneg %p213
      $region38: #{tpu_custom_call.1} parent=5 // pred_check_branch
        %216 = sbr.rel (%p214) target = $region40
      $region39: #{tpu_custom_call.1} parent=5 // pred_region
        %s217 = ssub.s32 %s12, 2
        // Predicated region
        $region41: #{tpu_custom_call.1} parent=39 // pred_check
          %p218 = pneg %p88
        $region42: #{tpu_custom_call.1} parent=39 // pred_check_branch
          %220 = sbr.rel (%p218) target = $region44
        $region43: #{tpu_custom_call.1} parent=39 // pred_region
          %s221 = sand.u32 %s73, 1
          %s222 = scalar_lea.sflag [#allocation4], %s221
          %s223 = sand.u32 %s73, 1
          %s224 = smul.addr %s223, 8
          %s225 = scalar_lea.vmem [#allocation5], %s224
          %227 = dma.done %s222, 128
        $region44: #{tpu_custom_call.1} parent=39 // pred_fallthru
          _
      $region40: #{tpu_custom_call.1} parent=5 // pred_fallthru
        _
    $region6: #{tpu_custom_call.1} parent=1 // loop_footer
      %s16 = sadd.s32 1, %s12
    $region7: #{tpu_custom_call.1} parent=1 // loop_footer_branch
      %11 = sbr.rel target = $region3
    $region8: #{tpu_custom_call.1} parent=1 // loop_exit
      _
    %228 = vsyncpa [#allocation3], 1
    %s229 = scalar_lea.sflag [#allocation3], 1
    %230 = vsyncpa %s229, 1
    %231 = vsyncpa [#allocation4], 1
    %s232 = scalar_lea.sflag [#allocation4], 1
    %233 = vsyncpa %s232, 1

</llo_original>
